<compile_context>
chip_gen: v7x
topology: tpu7x:2x2x1
jax: 0.10.0
libtpu: 0.0.40
codegen_flags: <defaults>
</compile_context>

<pallas_src>
import jax
import jax.numpy as jnp
from jax import lax
from jax.experimental import pallas as pl
from jax.experimental.pallas import tpu as pltpu


def _round_up(x, m):
    return (x + m - 1) // m * m


def mlp_kernel(x_ref,
               w1_ref, b1_ref,
               w2_ref, b2_ref,
               w3_ref, b3_ref,
               w4_ref, b4_ref,
               o_ref):
    """One batch tile of the MLP, computed feature-major (batch on lanes).

    x_ref : (TILE_B, in_dim) f32 -- native PyTorch layout, streamed from HBM
    w1    : (2, in_dim), w2 (20,2), w3 (3,20), w4 (2,3)   f32
    b*    : (out_features, 1)                              f32
    o_ref : (out_dim, TILE_B) f32 -- lane-dense output slab
    """
    x = x_ref[...]                                          # (TILE_B, in_dim)

    # Layer 1: contract both operands over in_dim:
    #   (2, in_dim) . (TILE_B, in_dim)^T -> (2, TILE_B)
    # Same contraction pattern as q @ k.T in attention; Mosaic folds the RHS
    # re-orientation into the MXU op, so no wrapper-side transpose of x.
    h = lax.dot_general(w1_ref[...], x, (((1,), (1,)), ((), ())),
                        preferred_element_type=jnp.float32) + b1_ref[...]
    h = jnp.maximum(h, 0.0)

    # Layer 2: (20, 2) @ (2, TILE_B) -> (20, TILE_B)
    h = jnp.dot(w2_ref[...], h, preferred_element_type=jnp.float32) + b2_ref[...]
    h = jnp.maximum(h, 0.0)

    # Layer 3: (3, 20) @ (20, TILE_B) -> (3, TILE_B)
    h = jnp.dot(w3_ref[...], h, preferred_element_type=jnp.float32) + b3_ref[...]
    h = jnp.maximum(h, 0.0)

    # Layer 4: (2, 3) @ (3, TILE_B) -> (2, TILE_B); Dropout (eval) == identity.
    h = jnp.dot(w4_ref[...], h, preferred_element_type=jnp.float32) + b4_ref[...]

    o_ref[...] = h.astype(o_ref.dtype)


def model03_forward(x, params, *, max_tile_b=32768, feature_major_out=False,
                    vmem_budget_bytes=20 * 1024 * 1024):
    """x: (batch, in_dim) f32.  params: PyTorch-layout weights w_i (out,in) f32
    and biases b_i (out,1) f32.  Returns (batch, out_dim) f32 (or
    (out_dim, batch) if feature_major_out=True)."""
    batch, in_dim = x.shape
    out_dim = params["w4"].shape[0]

    # --- batch tile selection -------------------------------------------
    # Big tiles amortize the ~0.35us/grid-step overhead.  Clamp so that
    #  (a) the double-buffered VMEM footprint stays under budget (safe for the
    #      32 MiB scoped limit on every generation),
    #  (b) we keep >= 4 tiles when the batch is large enough, so
    #      dimension_semantics=("parallel",) can use both v7x TensorCores.
    bytes_per_row = 4 * (2 * in_dim + 2 * out_dim) + 4 * 32   # x/out dbl-buf + intermediates
    tile_vmem = max(128, (vmem_budget_bytes // bytes_per_row) // 128 * 128)

    tile_b = min(max_tile_b, tile_vmem, _round_up(batch, 128))
    if batch >= 4 * 128:
        tile_b = min(tile_b, _round_up(pl.cdiv(batch, 4), 128))
    tile_b = max(128, _round_up(tile_b, 128))
    n_tiles = pl.cdiv(batch, tile_b)      # ragged last tile: Pallas partial block

    w1, w2, w3, w4 = params["w1"], params["w2"], params["w3"], params["w4"]
    b1, b2, b3, b4 = params["b1"], params["b2"], params["b3"], params["b4"]

    def const_spec(shape):
        # Full-array block, same block every grid step -> DMA'd once, resident.
        return pl.BlockSpec(shape, lambda i: (0, 0))

    flops = 2 * batch * (in_dim * 2 + 2 * 20 + 20 * 3 + 3 * out_dim)
    bytes_accessed = (int(x.size) * 4                       # x streamed once, native f32
                      + batch * out_dim * 4                 # f32 output slab
                      + sum(int(params[k].size) * 4 for k in params))

    out_t = pl.pallas_call(
        mlp_kernel,
        out_shape=jax.ShapeDtypeStruct((out_dim, batch), jnp.float32),
        grid_spec=pltpu.PrefetchScalarGridSpec(
            num_scalar_prefetch=0,
            grid=(n_tiles,),
            in_specs=[
                pl.BlockSpec((tile_b, in_dim), lambda i: (i, 0)),   # native x tiles
                const_spec(w1.shape), const_spec(b1.shape),
                const_spec(w2.shape), const_spec(b2.shape),
                const_spec(w3.shape), const_spec(b3.shape),
                const_spec(w4.shape), const_spec(b4.shape),
            ],
            out_specs=pl.BlockSpec((out_dim, tile_b), lambda i: (0, i)),
        ),
        compiler_params=pltpu.CompilerParams(
            dimension_semantics=("parallel",),
            vmem_limit_bytes=32 * 1024 * 1024),
        cost_estimate=pl.CostEstimate(
            flops=flops, transcendentals=0, bytes_accessed=bytes_accessed),
    )(x, w1, b1, w2, b2, w3, b3, w4, b4)

    if feature_major_out:
        return out_t                      # (out_dim, batch): skips wrapper transpose
    return out_t.T                        # PyTorch-facing (batch, out_dim)


def init_params(key, in_dim):
    """Deterministic init; PyTorch nn.Linear layout: w (out,in), b (out,1)."""
    dims = [(in_dim, 2), (2, 20), (20, 3), (3, 2)]
    params = {}
    for i, (fan_in, fan_out) in enumerate(dims, start=1):
        key, kw, kb = jax.random.split(key, 3)
        bound = 1.0 / jnp.sqrt(fan_in)  # PyTorch Linear default init range
        params[f"w{i}"] = jax.random.uniform(
            kw, (fan_out, fan_in), jnp.float32, -bound, bound)
        params[f"b{i}"] = jax.random.uniform(
            kb, (fan_out, 1), jnp.float32, -bound, bound)
    return params


def reference_forward(x, params):
    """Pure-JAX f32 reference (HIGHEST precision dots)."""
    h = x
    for i in (1, 2, 3, 4):
        h = jnp.dot(h, params[f"w{i}"].T,
                    precision=lax.Precision.HIGHEST) + params[f"b{i}"].T
        if i < 4:
            h = jnp.maximum(h, 0.0)
    return h


if __name__ == "__main__":
    key = jax.random.PRNGKey(0)
    key, kx1, kx2 = jax.random.split(key, 3)

    in_dim, out_dim = 16, 2
    params = init_params(key, in_dim)

    # Small single-tile case.
    x_small = jax.random.normal(kx1, (8, in_dim), dtype=jnp.float32)
    out_small = jax.block_until_ready(model03_forward(x_small, params))
    ref_small = reference_forward(x_small, params)
    assert out_small.shape == (8, out_dim), out_small.shape
    assert jnp.allclose(out_small, ref_small, atol=1e-2, rtol=1e-2), \
        "mismatch vs reference (small batch)"

    # Ragged multi-tile case (exercises the grid / partial-final-tile path).
    x_big = jax.random.normal(kx2, (333, in_dim), dtype=jnp.float32)
    out_big = jax.block_until_ready(
        model03_forward(x_big, params, max_tile_b=128))
    ref_big = reference_forward(x_big, params)
    assert out_big.shape == (333, out_dim), out_big.shape
    assert jnp.allclose(out_big, ref_big, atol=1e-2, rtol=1e-2), \
        "mismatch vs reference (multi-tile batch)"

    # Feature-major output path (no wrapper transpose).
    out_fm = jax.block_until_ready(
        model03_forward(x_big, params, feature_major_out=True))
    assert out_fm.shape == (out_dim, 333), out_fm.shape
    assert jnp.allclose(out_fm.T, ref_big, atol=1e-2, rtol=1e-2), \
        "mismatch vs reference (feature-major output)"

    print("KERNEL_OK")
</pallas_src>

<mosaic_0001>
module attributes {stable_mosaic.version = 11 : i64} {
  func.func @mlp_kernel(%arg0: i32, %arg1: memref<128x16xf32, #tpu.memory_space<vmem>>, %arg2: memref<2x16xf32, #tpu.memory_space<vmem>>, %arg3: memref<2x1xf32, #tpu.memory_space<vmem>>, %arg4: memref<20x2xf32, #tpu.memory_space<vmem>>, %arg5: memref<20x1xf32, #tpu.memory_space<vmem>>, %arg6: memref<3x20xf32, #tpu.memory_space<vmem>>, %arg7: memref<3x1xf32, #tpu.memory_space<vmem>>, %arg8: memref<2x3xf32, #tpu.memory_space<vmem>>, %arg9: memref<2x1xf32, #tpu.memory_space<vmem>>, %arg10: memref<2x128xf32, #tpu.memory_space<vmem>>) attributes {dimension_semantics = [#tpu.dimension_semantics<parallel>], iteration_bounds = array<i64: 1>, scalar_prefetch = 0 : i64, scratch_operands = 0 : i64, tpu.core_type = #tpu.core_type<tc>, window_params = [{transform_indices = @transform_0, window_bounds = array<i64: 128, 16>}, {pipeline_mode = #tpu.pipeline_mode<synchronous>, transform_indices = @transform_1, window_bounds = array<i64: 2, 16>}, {pipeline_mode = #tpu.pipeline_mode<synchronous>, transform_indices = @transform_2, window_bounds = array<i64: 2, 1>}, {pipeline_mode = #tpu.pipeline_mode<synchronous>, transform_indices = @transform_3, window_bounds = array<i64: 20, 2>}, {pipeline_mode = #tpu.pipeline_mode<synchronous>, transform_indices = @transform_4, window_bounds = array<i64: 20, 1>}, {pipeline_mode = #tpu.pipeline_mode<synchronous>, transform_indices = @transform_5, window_bounds = array<i64: 3, 20>}, {pipeline_mode = #tpu.pipeline_mode<synchronous>, transform_indices = @transform_6, window_bounds = array<i64: 3, 1>}, {pipeline_mode = #tpu.pipeline_mode<synchronous>, transform_indices = @transform_7, window_bounds = array<i64: 2, 3>}, {pipeline_mode = #tpu.pipeline_mode<synchronous>, transform_indices = @transform_8, window_bounds = array<i64: 2, 1>}, {transform_indices = @transform_9, window_bounds = array<i64: 2, 128>}]} {
    %c0 = arith.constant 0 : index
    %c0_0 = arith.constant 0 : index
    %0 = vector.load %arg1[%c0, %c0_0] : memref<128x16xf32, #tpu.memory_space<vmem>>, vector<128x16xf32>
    %c0_1 = arith.constant 0 : index
    %c0_2 = arith.constant 0 : index
    %1 = vector.load %arg2[%c0_1, %c0_2] : memref<2x16xf32, #tpu.memory_space<vmem>>, vector<2x16xf32>
    %cst = arith.constant dense<0.000000e+00> : vector<2x128xf32>
    %2 = tpu.matmul %1, %0, %cst {dimension_numbers = #tpu.dot_dimension_numbers<[1], [1], [0], [0], [0, 0, 1, 0], [], []>} : vector<2x16xf32>, vector<128x16xf32>, vector<2x128xf32> -> vector<2x128xf32>
    %c0_3 = arith.constant 0 : index
    %c0_4 = arith.constant 0 : index
    %3 = vector.load %arg3[%c0_3, %c0_4] : memref<2x1xf32, #tpu.memory_space<vmem>>, vector<2x1xf32>
    %4 = vector.broadcast %3 : vector<2x1xf32> to vector<2x128xf32>
    %5 = arith.addf %2, %4 : vector<2x128xf32>
    %cst_5 = arith.constant 0.000000e+00 : f32
    %6 = vector.broadcast %cst_5 : f32 to vector<2x128xf32>
    %7 = arith.maximumf %5, %6 : vector<2x128xf32>
    %c0_6 = arith.constant 0 : index
    %c0_7 = arith.constant 0 : index
    %8 = vector.load %arg4[%c0_6, %c0_7] : memref<20x2xf32, #tpu.memory_space<vmem>>, vector<20x2xf32>
    %cst_8 = arith.constant dense<0.000000e+00> : vector<20x128xf32>
    %9 = tpu.matmul %8, %7, %cst_8 {dimension_numbers = #tpu.dot_dimension_numbers<[1], [0], [0], [1], [0, 0, 1, 1], [], []>} : vector<20x2xf32>, vector<2x128xf32>, vector<20x128xf32> -> vector<20x128xf32>
    %c0_9 = arith.constant 0 : index
    %c0_10 = arith.constant 0 : index
    %10 = vector.load %arg5[%c0_9, %c0_10] : memref<20x1xf32, #tpu.memory_space<vmem>>, vector<20x1xf32>
    %11 = vector.broadcast %10 : vector<20x1xf32> to vector<20x128xf32>
    %12 = arith.addf %9, %11 : vector<20x128xf32>
    %cst_11 = arith.constant 0.000000e+00 : f32
    %13 = vector.broadcast %cst_11 : f32 to vector<20x128xf32>
    %14 = arith.maximumf %12, %13 : vector<20x128xf32>
    %c0_12 = arith.constant 0 : index
    %c0_13 = arith.constant 0 : index
    %15 = vector.load %arg6[%c0_12, %c0_13] : memref<3x20xf32, #tpu.memory_space<vmem>>, vector<3x20xf32>
    %cst_14 = arith.constant dense<0.000000e+00> : vector<3x128xf32>
    %16 = tpu.matmul %15, %14, %cst_14 {dimension_numbers = #tpu.dot_dimension_numbers<[1], [0], [0], [1], [0, 0, 1, 1], [], []>} : vector<3x20xf32>, vector<20x128xf32>, vector<3x128xf32> -> vector<3x128xf32>
    %c0_15 = arith.constant 0 : index
    %c0_16 = arith.constant 0 : index
    %17 = vector.load %arg7[%c0_15, %c0_16] : memref<3x1xf32, #tpu.memory_space<vmem>>, vector<3x1xf32>
    %18 = vector.broadcast %17 : vector<3x1xf32> to vector<3x128xf32>
    %19 = arith.addf %16, %18 : vector<3x128xf32>
    %cst_17 = arith.constant 0.000000e+00 : f32
    %20 = vector.broadcast %cst_17 : f32 to vector<3x128xf32>
    %21 = arith.maximumf %19, %20 : vector<3x128xf32>
    %c0_18 = arith.constant 0 : index
    %c0_19 = arith.constant 0 : index
    %22 = vector.load %arg8[%c0_18, %c0_19] : memref<2x3xf32, #tpu.memory_space<vmem>>, vector<2x3xf32>
    %cst_20 = arith.constant dense<0.000000e+00> : vector<2x128xf32>
    %23 = tpu.matmul %22, %21, %cst_20 {dimension_numbers = #tpu.dot_dimension_numbers<[1], [0], [0], [1], [0, 0, 1, 1], [], []>} : vector<2x3xf32>, vector<3x128xf32>, vector<2x128xf32> -> vector<2x128xf32>
    %c0_21 = arith.constant 0 : index
    %c0_22 = arith.constant 0 : index
    %24 = vector.load %arg9[%c0_21, %c0_22] : memref<2x1xf32, #tpu.memory_space<vmem>>, vector<2x1xf32>
    %25 = vector.broadcast %24 : vector<2x1xf32> to vector<2x128xf32>
    %26 = arith.addf %23, %25 : vector<2x128xf32>
    %c0_23 = arith.constant 0 : index
    %c0_24 = arith.constant 0 : index
    %27 = vector.load %arg10[%c0_23, %c0_24] : memref<2x128xf32, #tpu.memory_space<vmem>>, vector<2x128xf32>
    tpu.vector_store %arg10[%c0_23, %c0_24], %26 {strides = array<i32>} : memref<2x128xf32, #tpu.memory_space<vmem>>, vector<2x128xf32>,
    return
  }
  func.func @transform_0(%arg0: i32) -> (i32, i32) {
    %c0_i32 = arith.constant 0 : i32
    %c0_i32_0 = arith.constant 0 : i32
    return %arg0, %c0_i32 : i32, i32
  }
  func.func @transform_1(%arg0: i32) -> (i32, i32) {
    %c0_i32 = arith.constant 0 : i32
    %c0_i32_0 = arith.constant 0 : i32
    %c0_i32_1 = arith.constant 0 : i32
    return %c0_i32, %c0_i32_0 : i32, i32
  }
  func.func @transform_2(%arg0: i32) -> (i32, i32) {
    %c0_i32 = arith.constant 0 : i32
    %c0_i32_0 = arith.constant 0 : i32
    %c0_i32_1 = arith.constant 0 : i32
    return %c0_i32, %c0_i32_0 : i32, i32
  }
  func.func @transform_3(%arg0: i32) -> (i32, i32) {
    %c0_i32 = arith.constant 0 : i32
    %c0_i32_0 = arith.constant 0 : i32
    %c0_i32_1 = arith.constant 0 : i32
    return %c0_i32, %c0_i32_0 : i32, i32
  }
  func.func @transform_4(%arg0: i32) -> (i32, i32) {
    %c0_i32 = arith.constant 0 : i32
    %c0_i32_0 = arith.constant 0 : i32
    %c0_i32_1 = arith.constant 0 : i32
    return %c0_i32, %c0_i32_0 : i32, i32
  }
  func.func @transform_5(%arg0: i32) -> (i32, i32) {
    %c0_i32 = arith.constant 0 : i32
    %c0_i32_0 = arith.constant 0 : i32
    %c0_i32_1 = arith.constant 0 : i32
    return %c0_i32, %c0_i32_0 : i32, i32
  }
  func.func @transform_6(%arg0: i32) -> (i32, i32) {
    %c0_i32 = arith.constant 0 : i32
    %c0_i32_0 = arith.constant 0 : i32
    %c0_i32_1 = arith.constant 0 : i32
    return %c0_i32, %c0_i32_0 : i32, i32
  }
  func.func @transform_7(%arg0: i32) -> (i32, i32) {
    %c0_i32 = arith.constant 0 : i32
    %c0_i32_0 = arith.constant 0 : i32
    %c0_i32_1 = arith.constant 0 : i32
    return %c0_i32, %c0_i32_0 : i32, i32
  }
  func.func @transform_8(%arg0: i32) -> (i32, i32) {
    %c0_i32 = arith.constant 0 : i32
    %c0_i32_0 = arith.constant 0 : i32
    %c0_i32_1 = arith.constant 0 : i32
    return %c0_i32, %c0_i32_0 : i32, i32
  }
  func.func @transform_9(%arg0: i32) -> (i32, i32) {
    %c0_i32 = arith.constant 0 : i32
    %c0_i32_0 = arith.constant 0 : i32
    return %c0_i32, %arg0 : i32, i32
  }
}

</mosaic_0001>

<llo_original>
// kernel: tpu_custom_call.1
$region0: #{tpu_custom_call.1}
  #allocation0 [shape = 'u32[]', space=smem, size = 0x4, offset = 0x4, fixed_abs, tag = 'smem constant byte address 0x4 - core index']
  #allocation1 [shape = 'u32[144,128]{1,0:T(1,128)}', space=vmem, size = 0x12000, scoped, tag = 'internal scratch']
  %s0 = inlined_call_operand.vmem [shape: f32[8,16], index: 0, kind: input, shape index: {}]
  %s1 = inlined_call_operand.vmem [shape: f32[2,16], index: 1, kind: input, shape index: {}]
  %s2 = inlined_call_operand.vmem [shape: f32[2,1], index: 2, kind: input, shape index: {}]
  %s3 = inlined_call_operand.vmem [shape: f32[20,2], index: 3, kind: input, shape index: {}]
  %s4 = inlined_call_operand.vmem [shape: f32[20,1], index: 4, kind: input, shape index: {}]
  %s5 = inlined_call_operand.vmem [shape: f32[3,20], index: 5, kind: input, shape index: {}]
  %s6 = inlined_call_operand.vmem [shape: f32[3,1], index: 6, kind: input, shape index: {}]
  %s7 = inlined_call_operand.vmem [shape: f32[2,3], index: 7, kind: input, shape index: {}]
  %s8 = inlined_call_operand.vmem [shape: f32[2,1], index: 8, kind: input, shape index: {}]
  %s9 = inlined_call_operand.hbm [shape: f32[2,8], index: 9, kind: output, shape index: {}]
  %s10 = sld [smem:[#allocation0]]
  $region46: #{tpu_custom_call.1} parent=0
    _
  %s12 = ssub.s32 1, %s10
  %s13 = scalar_select 0, %s12, %s10
  $region1: #{tpu_custom_call.1} parent=0
    #allocation2 [shape = 'u8[1024]{0}', space=vmem, size = 0x400, scoped, tag = 'output window, operand 0, single buffered']
    #allocation3 [shape = 's32[1]{0}', space=sflag, size = 0x4, scoped, tag = 'scoped memory for tpu_custom_call.1']
    %14 = vsyncpa [#allocation3], 0
    // Predicated region
    $region2: #{tpu_custom_call.1} parent=1 // pred_check
      _
    $region3: #{tpu_custom_call.1} parent=1 // pred_check_branch
      %16 = sbr.rel (0) target = $region5
    $region4: #{tpu_custom_call.1} parent=1 // pred_region
      _
    $region5: #{tpu_custom_call.1} parent=1 // pred_fallthru
      _
    // Predicated region
    $region6: #{tpu_custom_call.1} parent=1 // pred_check
      _
    $region7: #{tpu_custom_call.1} parent=1 // pred_check_branch
      %18 = sbr.rel (0) target = $region9
    $region8: #{tpu_custom_call.1} parent=1 // pred_region
      _
    $region9: #{tpu_custom_call.1} parent=1 // pred_fallthru
      _
    // Predicated region
    $region10: #{tpu_custom_call.1} parent=1 // pred_check
      _
    $region11: #{tpu_custom_call.1} parent=1 // pred_check_branch
      %20 = sbr.rel (0) target = $region13
    $region12: #{tpu_custom_call.1} parent=1 // pred_region
      _
    $region13: #{tpu_custom_call.1} parent=1 // pred_fallthru
      _
    // Predicated region
    $region14: #{tpu_custom_call.1} parent=1 // pred_check
      _
    $region15: #{tpu_custom_call.1} parent=1 // pred_check_branch
      %22 = sbr.rel (0) target = $region17
    $region16: #{tpu_custom_call.1} parent=1 // pred_region
      _
    $region17: #{tpu_custom_call.1} parent=1 // pred_fallthru
      _
    // Predicated region
    $region18: #{tpu_custom_call.1} parent=1 // pred_check
      _
    $region19: #{tpu_custom_call.1} parent=1 // pred_check_branch
      %24 = sbr.rel (0) target = $region21
    $region20: #{tpu_custom_call.1} parent=1 // pred_region
      _
    $region21: #{tpu_custom_call.1} parent=1 // pred_fallthru
      _
    // Predicated region
    $region22: #{tpu_custom_call.1} parent=1 // pred_check
      _
    $region23: #{tpu_custom_call.1} parent=1 // pred_check_branch
      %26 = sbr.rel (0) target = $region25
    $region24: #{tpu_custom_call.1} parent=1 // pred_region
      _
    $region25: #{tpu_custom_call.1} parent=1 // pred_fallthru
      _
    // Predicated region
    $region26: #{tpu_custom_call.1} parent=1 // pred_check
      _
    $region27: #{tpu_custom_call.1} parent=1 // pred_check_branch
      %28 = sbr.rel (0) target = $region29
    $region28: #{tpu_custom_call.1} parent=1 // pred_region
      _
    $region29: #{tpu_custom_call.1} parent=1 // pred_fallthru
      _
    // Predicated region
    $region30: #{tpu_custom_call.1} parent=1 // pred_check
      _
    $region31: #{tpu_custom_call.1} parent=1 // pred_check_branch
      %30 = sbr.rel (0) target = $region33
    $region32: #{tpu_custom_call.1} parent=1 // pred_region
      _
    $region33: #{tpu_custom_call.1} parent=1 // pred_fallthru
      _
    // Predicated region
    $region34: #{tpu_custom_call.1} parent=1 // pred_check
      _
    $region35: #{tpu_custom_call.1} parent=1 // pred_check_branch
      %32 = sbr.rel (0) target = $region37
    $region36: #{tpu_custom_call.1} parent=1 // pred_region
      _
    $region37: #{tpu_custom_call.1} parent=1 // pred_fallthru
      _
    %v33 = vld [vmem:[%s0] sm:$0xff]
    %v34 = vld [vmem:[%s0 + $0x8] sm:$0xff]
    %v35 = vld [vmem:[%s0 + $0x10] sm:$0xff]
    %v36 = vld [vmem:[%s0 + $0x18] sm:$0xff]
    %v37 = vld [vmem:[%s0 + $0x20] sm:$0xff]
    %v38 = vld [vmem:[%s0 + $0x28] sm:$0xff]
    %v39 = vld [vmem:[%s0 + $0x30] sm:$0xff]
    %v40 = vld [vmem:[%s0 + $0x38] sm:$0xff]
    %v41 = vld [vmem:[%s0 + $0x40] sm:$0xff]
    %v42 = vld [vmem:[%s0 + $0x48] sm:$0xff]
    %v43 = vld [vmem:[%s0 + $0x50] sm:$0xff]
    %v44 = vld [vmem:[%s0 + $0x58] sm:$0xff]
    %v45 = vld [vmem:[%s0 + $0x60] sm:$0xff]
    %v46 = vld [vmem:[%s0 + $0x68] sm:$0xff]
    %v47 = vld [vmem:[%s0 + $0x70] sm:$0xff]
    %v48 = vld [vmem:[%s0 + $0x78] sm:$0xff]
    %v49 = vld [vmem:[%s1] sm:$0x3]
    %v50 = vld [vmem:[%s2] sm:$0x3]
    %52 = vset.pattern.permute.xlu0 0
    %53 = vperm.xlu0 %52, %v50
    %v54 = vpop.permute.xlu0 %53
    %vm56 = vcmask 130048
    %v58 = vsel %vm56, %v49, 0
    %v61 = vsel %vm56, %v33, 0
    %v64 = vsel %vm56, %v34, 0
    %v67 = vsel %vm56, %v35, 0
    %v70 = vsel %vm56, %v36, 0
    %v73 = vsel %vm56, %v37, 0
    %v76 = vsel %vm56, %v38, 0
    %v79 = vsel %vm56, %v39, 0
    %v82 = vsel %vm56, %v40, 0
    %v85 = vsel %vm56, %v41, 0
    %v88 = vsel %vm56, %v42, 0
    %v91 = vsel %vm56, %v43, 0
    %v94 = vsel %vm56, %v44, 0
    %v97 = vsel %vm56, %v45, 0
    %v100 = vsel %vm56, %v46, 0
    %v103 = vsel %vm56, %v47, 0
    %v106 = vsel %vm56, %v48, 0
    %108 = vmatprep.subr.mxu0 0.0
    %109 = vmatpush1.xpose.msra.mxu0 %v61
    %110 = vmatprep.subr.mxu0 0.0
    %111 = vmatpush1.xpose.msra.mxu0 %v64
    %112 = vmatprep.subr.mxu0 0.0
    %113 = vmatpush1.xpose.msra.mxu0 %v67
    %114 = vmatprep.subr.mxu0 0.0
    %115 = vmatpush1.xpose.msra.mxu0 %v70
    %116 = vmatprep.subr.mxu0 0.0
    %117 = vmatpush1.xpose.msra.mxu0 %v73
    %118 = vmatprep.subr.mxu0 0.0
    %119 = vmatpush1.xpose.msra.mxu0 %v76
    %120 = vmatprep.subr.mxu0 0.0
    %121 = vmatpush1.xpose.msra.mxu0 %v79
    %122 = vmatprep.subr.mxu0 0.0
    %123 = vmatpush1.xpose.msra.mxu0 %v82
    %124 = vmatprep.subr.mxu0 0.0
    %125 = vmatpush1.xpose.msra.mxu0 %v85
    %126 = vmatprep.subr.mxu0 0.0
    %127 = vmatpush1.xpose.msra.mxu0 %v88
    %128 = vmatprep.subr.mxu0 0.0
    %129 = vmatpush1.xpose.msra.mxu0 %v91
    %130 = vmatprep.subr.mxu0 0.0
    %131 = vmatpush1.xpose.msra.mxu0 %v94
    %132 = vmatprep.subr.mxu0 0.0
    %133 = vmatpush1.xpose.msra.mxu0 %v97
    %134 = vmatprep.subr.mxu0 0.0
    %135 = vmatpush1.xpose.msra.mxu0 %v100
    %136 = vmatprep.subr.mxu0 0.0
    %137 = vmatpush1.xpose.msra.mxu0 %v103
    %138 = vmatprep.subr.mxu0 0.0
    %139 = vmatpush1.xpose.msra.mxu0 %v106
    %140 = vmatprep.subr.mxu0 0.0
    %141 = vmatpush1.xpose.msra.mxu0 0.0
    %142 = vmatprep.subr.mxu0 0.0
    %143 = vmatpush1.xpose.msra.mxu0 0.0
    %144 = vmatprep.subr.mxu0 0.0
    %145 = vmatpush1.xpose.msra.mxu0 0.0
    %146 = vmatprep.subr.mxu0 0.0
    %147 = vmatpush1.xpose.msra.mxu0 0.0
    %148 = vmatprep.subr.mxu0 0.0
    %149 = vmatpush1.xpose.msra.mxu0 0.0
    %150 = vmatprep.subr.mxu0 0.0
    %151 = vmatpush1.xpose.msra.mxu0 0.0
    %152 = vmatprep.subr.mxu0 0.0
    %153 = vmatpush1.xpose.msra.mxu0 0.0
    %154 = vmatprep.subr.mxu0 0.0
    %155 = vmatpush1.xpose.msra.mxu0 0.0
    %156 = vmatprep.subr.mxu0 0.0
    %157 = vmatpush1.xpose.msra.mxu0 0.0
    %158 = vmatprep.subr.mxu0 0.0
    %159 = vmatpush1.xpose.msra.mxu0 0.0
    %160 = vmatprep.subr.mxu0 0.0
    %161 = vmatpush1.xpose.msra.mxu0 0.0
    %162 = vmatprep.subr.mxu0 0.0
    %163 = vmatpush1.xpose.msra.mxu0 0.0
    %164 = vmatprep.subr.mxu0 0.0
    %165 = vmatpush1.xpose.msra.mxu0 0.0
    %166 = vmatprep.subr.mxu0 0.0
    %167 = vmatpush1.xpose.msra.mxu0 0.0
    %168 = vmatprep.subr.mxu0 0.0
    %169 = vmatpush1.xpose.msra.mxu0 0.0
    %170 = vmatprep.subr.mxu0 0.0
    %171 = vmatpush1.xpose.msra.mxu0 0.0
    %172 = vmatprep.mubr.f32.mxu0 0.0
    %173 = vmatmul.mubr.f32.gmra.mrb[0].mxu0 %v58
    %v174 = vpop.f32.mrb[0].mxu0
    %v175 = vadd.f32 %v54, %v174
    %v176 = vpop.f32.mrb[0].mxu0
    %177 = vdwg.mxu0
    %v178 = vmax.f32 %v175, 0.0
    %v179 = vld [vmem:[%s3] sm:$0xff]
    %v180 = vld [vmem:[%s3 + $0x8] sm:$0xff]
    %v181 = vld [vmem:[%s3 + $0x10] sm:$0xf]
    %v182 = vld [vmem:[%s4] sm:$0xff]
    %v183 = vld [vmem:[%s4 + $0x8] sm:$0xff]
    %v184 = vld [vmem:[%s4 + $0x10] sm:$0xf]
    %186 = vset.pattern.permute.xlu0 0
    %187 = vperm.xlu0 %186, %v182
    %v188 = vpop.permute.xlu0 %187
    %191 = vset.pattern.permute.xlu0 0
    %192 = vperm.xlu0 %191, %v183
    %v193 = vpop.permute.xlu0 %192
    %196 = vset.pattern.permute.xlu0 0
    %197 = vperm.xlu0 %196, %v184
    %v198 = vpop.permute.xlu0 %197
    %vm200 = vcmask 15360
    %v202 = vsel %vm200, %v179, 0
    %v205 = vsel %vm200, %v180, 0
    %v208 = vsel %vm200, %v181, 0
    %vm210 = vcmask 1041408
    %v212 = vsel %vm210, %v178, 0
    %214 = vmatprep.subr.mxu0 0.0
    %215 = vmatpush1.msra.mxu0 %v212
    %216 = vmatprep.subr.mxu0 0.0
    %217 = vmatpush1.msra.mxu0 0.0
    %218 = vmatprep.subr.mxu0 0.0
    %219 = vmatpush1.msra.mxu0 0.0
    %220 = vmatprep.subr.mxu0 0.0
    %221 = vmatpush1.msra.mxu0 0.0
    %222 = vmatprep.subr.mxu0 0.0
    %223 = vmatpush1.msra.mxu0 0.0
    %224 = vmatprep.subr.mxu0 0.0
    %225 = vmatpush1.msra.mxu0 0.0
    %226 = vmatprep.subr.mxu0 0.0
    %227 = vmatpush1.msra.mxu0 0.0
    %228 = vmatprep.subr.mxu0 0.0
    %229 = vmatpush1.msra.mxu0 0.0
    %230 = vmatprep.subr.mxu0 0.0
    %231 = vmatpush1.msra.mxu0 0.0
    %232 = vmatprep.subr.mxu0 0.0
    %233 = vmatpush1.msra.mxu0 0.0
    %234 = vmatprep.subr.mxu0 0.0
    %235 = vmatpush1.msra.mxu0 0.0
    %236 = vmatprep.subr.mxu0 0.0
    %237 = vmatpush1.msra.mxu0 0.0
    %238 = vmatprep.subr.mxu0 0.0
    %239 = vmatpush1.msra.mxu0 0.0
    %240 = vmatprep.subr.mxu0 0.0
    %241 = vmatpush1.msra.mxu0 0.0
    %242 = vmatprep.subr.mxu0 0.0
    %243 = vmatpush1.msra.mxu0 0.0
    %244 = vmatprep.subr.mxu0 0.0
    %245 = vmatpush1.msra.mxu0 0.0
    %246 = vmatprep.subr.mxu0 0.0
    %247 = vmatpush1.msra.mxu0 0.0
    %248 = vmatprep.subr.mxu0 0.0
    %249 = vmatpush1.msra.mxu0 0.0
    %250 = vmatprep.subr.mxu0 0.0
    %251 = vmatpush1.msra.mxu0 0.0
    %252 = vmatprep.subr.mxu0 0.0
    %253 = vmatpush1.msra.mxu0 0.0
    %254 = vmatprep.subr.mxu0 0.0
    %255 = vmatpush1.msra.mxu0 0.0
    %256 = vmatprep.subr.mxu0 0.0
    %257 = vmatpush1.msra.mxu0 0.0
    %258 = vmatprep.subr.mxu0 0.0
    %259 = vmatpush1.msra.mxu0 0.0
    %260 = vmatprep.subr.mxu0 0.0
    %261 = vmatpush1.msra.mxu0 0.0
    %262 = vmatprep.subr.mxu0 0.0
    %263 = vmatpush1.msra.mxu0 0.0
    %264 = vmatprep.subr.mxu0 0.0
    %265 = vmatpush1.msra.mxu0 0.0
    %266 = vmatprep.subr.mxu0 0.0
    %267 = vmatpush1.msra.mxu0 0.0
    %268 = vmatprep.subr.mxu0 0.0
    %269 = vmatpush1.msra.mxu0 0.0
    %270 = vmatprep.subr.mxu0 0.0
    %271 = vmatpush1.msra.mxu0 0.0
    %272 = vmatprep.subr.mxu0 0.0
    %273 = vmatpush1.msra.mxu0 0.0
    %274 = vmatprep.subr.mxu0 0.0
    %275 = vmatpush1.msra.mxu0 0.0
    %276 = vmatprep.subr.mxu0 0.0
    %277 = vmatpush1.msra.mxu0 0.0
    %278 = vmatprep.mubr.f32.mxu0 0.0
    %279 = vmatmul.mubr.f32.gmra.mrb[0].mxu0 %v202
    %v280 = vpop.f32.mrb[0].mxu0
    %v281 = vadd.f32 %v188, %v280
    %v282 = vpop.f32.mrb[0].mxu0
    %283 = vmatprep.mubr.f32.mxu0 0.0
    %284 = vmatmul.mubr.f32.gmra.mrb[0].mxu0 %v205
    %v285 = vpop.f32.mrb[0].mxu0
    %v286 = vadd.f32 %v193, %v285
    %v287 = vpop.f32.mrb[0].mxu0
    %288 = vmatprep.mubr.f32.mxu0 0.0
    %289 = vmatmul.mubr.f32.gmra.mrb[0].mxu0 %v208
    %v290 = vpop.f32.mrb[0].mxu0
    %v291 = vadd.f32 %v198, %v290
    %v292 = vpop.f32.mrb[0].mxu0
    %293 = vdwg.mxu0
    %v294 = vmax.f32 %v281, 0.0
    %v295 = vmax.f32 %v286, 0.0
    %v296 = vmax.f32 %v291, 0.0
    %v297 = vld [vmem:[%s5] sm:$0x7]
    %v298 = vld [vmem:[%s6] sm:$0x7]
    %300 = vset.pattern.permute.xlu0 0
    %301 = vperm.xlu0 %300, %v298
    %v302 = vpop.permute.xlu0 %301
    %vm304 = vcmask 162816
    %v306 = vsel %vm304, %v297, 0
    %vm308 = vcmask 1043456
    %v310 = vsel %vm308, %v296, 0
    %312 = vmatprep.subr.mxu0 0.0
    %313 = vmatpush1.msra.mxu0 %v294
    %314 = vmatprep.subr.mxu0 0.0
    %315 = vmatpush1.msra.mxu0 %v295
    %316 = vmatprep.subr.mxu0 0.0
    %317 = vmatpush1.msra.mxu0 %v310
    %318 = vmatprep.subr.mxu0 0.0
    %319 = vmatpush1.msra.mxu0 0.0
    %320 = vmatprep.subr.mxu0 0.0
    %321 = vmatpush1.msra.mxu0 0.0
    %322 = vmatprep.subr.mxu0 0.0
    %323 = vmatpush1.msra.mxu0 0.0
    %324 = vmatprep.subr.mxu0 0.0
    %325 = vmatpush1.msra.mxu0 0.0
    %326 = vmatprep.subr.mxu0 0.0
    %327 = vmatpush1.msra.mxu0 0.0
    %328 = vmatprep.subr.mxu0 0.0
    %329 = vmatpush1.msra.mxu0 0.0
    %330 = vmatprep.subr.mxu0 0.0
    %331 = vmatpush1.msra.mxu0 0.0
    %332 = vmatprep.subr.mxu0 0.0
    %333 = vmatpush1.msra.mxu0 0.0
    %334 = vmatprep.subr.mxu0 0.0
    %335 = vmatpush1.msra.mxu0 0.0
    %336 = vmatprep.subr.mxu0 0.0
    %337 = vmatpush1.msra.mxu0 0.0
    %338 = vmatprep.subr.mxu0 0.0
    %339 = vmatpush1.msra.mxu0 0.0
    %340 = vmatprep.subr.mxu0 0.0
    %341 = vmatpush1.msra.mxu0 0.0
    %342 = vmatprep.subr.mxu0 0.0
    %343 = vmatpush1.msra.mxu0 0.0
    %344 = vmatprep.subr.mxu0 0.0
    %345 = vmatpush1.msra.mxu0 0.0
    %346 = vmatprep.subr.mxu0 0.0
    %347 = vmatpush1.msra.mxu0 0.0
    %348 = vmatprep.subr.mxu0 0.0
    %349 = vmatpush1.msra.mxu0 0.0
    %350 = vmatprep.subr.mxu0 0.0
    %351 = vmatpush1.msra.mxu0 0.0
    %352 = vmatprep.subr.mxu0 0.0
    %353 = vmatpush1.msra.mxu0 0.0
    %354 = vmatprep.subr.mxu0 0.0
    %355 = vmatpush1.msra.mxu0 0.0
    %356 = vmatprep.subr.mxu0 0.0
    %357 = vmatpush1.msra.mxu0 0.0
    %358 = vmatprep.subr.mxu0 0.0
    %359 = vmatpush1.msra.mxu0 0.0
    %360 = vmatprep.subr.mxu0 0.0
    %361 = vmatpush1.msra.mxu0 0.0
    %362 = vmatprep.subr.mxu0 0.0
    %363 = vmatpush1.msra.mxu0 0.0
    %364 = vmatprep.subr.mxu0 0.0
    %365 = vmatpush1.msra.mxu0 0.0
    %366 = vmatprep.subr.mxu0 0.0
    %367 = vmatpush1.msra.mxu0 0.0
    %368 = vmatprep.subr.mxu0 0.0
    %369 = vmatpush1.msra.mxu0 0.0
    %370 = vmatprep.subr.mxu0 0.0
    %371 = vmatpush1.msra.mxu0 0.0
    %372 = vmatprep.subr.mxu0 0.0
    %373 = vmatpush1.msra.mxu0 0.0
    %374 = vmatprep.subr.mxu0 0.0
    %375 = vmatpush1.msra.mxu0 0.0
    %376 = vmatprep.mubr.f32.mxu0 0.0
    %377 = vmatmul.mubr.f32.gmra.mrb[0].mxu0 %v306
    %v378 = vpop.f32.mrb[0].mxu0
    %v379 = vadd.f32 %v302, %v378
    %v380 = vpop.f32.mrb[0].mxu0
    %381 = vdwg.mxu0
    %v382 = vmax.f32 %v379, 0.0
    %v383 = vld [vmem:[%s7] sm:$0x3]
    %v384 = vld [vmem:[%s8] sm:$0x3]
    %386 = vset.pattern.permute.xlu0 0
    %387 = vperm.xlu0 %386, %v384
    %v388 = vpop.permute.xlu0 %387
    %vm390 = vcmask 23552
    %v392 = vsel %vm390, %v383, 0
    %vm394 = vcmask 1042432
    %v396 = vsel %vm394, %v382, 0
    %398 = vmatprep.subr.mxu0 0.0
    %399 = vmatpush1.msra.mxu0 %v396
    %400 = vmatprep.subr.mxu0 0.0
    %401 = vmatpush1.msra.mxu0 0.0
    %402 = vmatprep.subr.mxu0 0.0
    %403 = vmatpush1.msra.mxu0 0.0
    %404 = vmatprep.subr.mxu0 0.0
    %405 = vmatpush1.msra.mxu0 0.0
    %406 = vmatprep.subr.mxu0 0.0
    %407 = vmatpush1.msra.mxu0 0.0
    %408 = vmatprep.subr.mxu0 0.0
    %409 = vmatpush1.msra.mxu0 0.0
    %410 = vmatprep.subr.mxu0 0.0
    %411 = vmatpush1.msra.mxu0 0.0
    %412 = vmatprep.subr.mxu0 0.0
    %413 = vmatpush1.msra.mxu0 0.0
    %414 = vmatprep.subr.mxu0 0.0
    %415 = vmatpush1.msra.mxu0 0.0
    %416 = vmatprep.subr.mxu0 0.0
    %417 = vmatpush1.msra.mxu0 0.0
    %418 = vmatprep.subr.mxu0 0.0
    %419 = vmatpush1.msra.mxu0 0.0
    %420 = vmatprep.subr.mxu0 0.0
    %421 = vmatpush1.msra.mxu0 0.0
    %422 = vmatprep.subr.mxu0 0.0
    %423 = vmatpush1.msra.mxu0 0.0
    %424 = vmatprep.subr.mxu0 0.0
    %425 = vmatpush1.msra.mxu0 0.0
    %426 = vmatprep.subr.mxu0 0.0
    %427 = vmatpush1.msra.mxu0 0.0
    %428 = vmatprep.subr.mxu0 0.0
    %429 = vmatpush1.msra.mxu0 0.0
    %430 = vmatprep.subr.mxu0 0.0
    %431 = vmatpush1.msra.mxu0 0.0
    %432 = vmatprep.subr.mxu0 0.0
    %433 = vmatpush1.msra.mxu0 0.0
    %434 = vmatprep.subr.mxu0 0.0
    %435 = vmatpush1.msra.mxu0 0.0
    %436 = vmatprep.subr.mxu0 0.0
    %437 = vmatpush1.msra.mxu0 0.0
    %438 = vmatprep.subr.mxu0 0.0
    %439 = vmatpush1.msra.mxu0 0.0
    %440 = vmatprep.subr.mxu0 0.0
    %441 = vmatpush1.msra.mxu0 0.0
    %442 = vmatprep.subr.mxu0 0.0
    %443 = vmatpush1.msra.mxu0 0.0
    %444 = vmatprep.subr.mxu0 0.0
    %445 = vmatpush1.msra.mxu0 0.0
    %446 = vmatprep.subr.mxu0 0.0
    %447 = vmatpush1.msra.mxu0 0.0
    %448 = vmatprep.subr.mxu0 0.0
    %449 = vmatpush1.msra.mxu0 0.0
    %450 = vmatprep.subr.mxu0 0.0
    %451 = vmatpush1.msra.mxu0 0.0
    %452 = vmatprep.subr.mxu0 0.0
    %453 = vmatpush1.msra.mxu0 0.0
    %454 = vmatprep.subr.mxu0 0.0
    %455 = vmatpush1.msra.mxu0 0.0
    %456 = vmatprep.subr.mxu0 0.0
    %457 = vmatpush1.msra.mxu0 0.0
    %458 = vmatprep.subr.mxu0 0.0
    %459 = vmatpush1.msra.mxu0 0.0
    %460 = vmatprep.subr.mxu0 0.0
    %461 = vmatpush1.msra.mxu0 0.0
    %462 = vmatprep.mubr.f32.mxu0 0.0
    %463 = vmatmul.mubr.f32.gmra.mrb[0].mxu0 %v392
    %v464 = vpop.f32.mrb[0].mxu0
    %v465 = vadd.f32 %v388, %v464
    %v466 = vpop.f32.mrb[0].mxu0
    %467 = vdwg.mxu0
    %468 = vst [vmem:[#allocation2] sm:$0x3] %v465
    // Predicated region
    $region38: #{tpu_custom_call.1} parent=1 // pred_check
      _
    $region39: #{tpu_custom_call.1} parent=1 // pred_check_branch
      %470 = sbr.rel (0) target = $region41
    $region40: #{tpu_custom_call.1} parent=1 // pred_region
      %s472 = ssub.s32 32, 32
      %473 = vsyncadd [#allocation3], %s472
      %s475 = sshll.u32 [#allocation2], 4
      %s476 = int_to_ptr.vmem [resolvable:$true] %s475
      %478 = dma.vmem_to_hbm [thread:$0]  %s476, 32, %s9, [#allocation3]
    $region41: #{tpu_custom_call.1} parent=1 // pred_fallthru
      _
    // Predicated region
    $region42: #{tpu_custom_call.1} parent=1 // pred_check
      _
    $region43: #{tpu_custom_call.1} parent=1 // pred_check_branch
      %480 = sbr.rel (0) target = $region45
    $region44: #{tpu_custom_call.1} parent=1 // pred_region
      %481 = dma.done [#allocation3], 32
    $region45: #{tpu_custom_call.1} parent=1 // pred_fallthru
      _
    %482 = vsyncpa [#allocation3], 1

</llo_original>
